<compile_context>
chip_gen: v5e
topology: v5e:2x2
jax: 0.10.0
libtpu: 0.0.40
codegen_flags: <defaults>
</compile_context>

<pallas_src>
import jax
import jax.numpy as jnp
from jax.experimental import pallas as pl
from jax.experimental.pallas import tpu as pltpu


def _diag_dgl_kernel(w_ref, feat_ref, out_ref):
    # w_ref:    (1,  tl)  broadcast row of diagonal weights (VMEM-resident)
    # feat_ref: (tm, tl)  tile of node features
    # out_ref:  (tm, tl)
    out_ref[...] = feat_ref[...] * w_ref[...]


def _round_up(x, m):
    return (x + m - 1) // m * m


def _vmem_capacity_bytes():
    try:
        return int(pltpu.get_tpu_info().vmem_capacity_bytes)
    except Exception:
        return 64 << 20  # conservative default (v7x per-TC VMEM)


def _pick_tiles(N, D, itemsize, vmem):
    # Sublane packing: one vreg holds 8 f32 rows, 16 bf16 rows, 32 int8 rows.
    sublane_align = max(8, 32 // itemsize)

    # Per-tile budget: live VMEM ~= 2 x (feat-in + out) tiles + a tiny W row.
    budget = min(vmem // 3, 48 << 20)

    # Lane tile: full feature width (contiguous DMA runs, resident W row),
    # unless D is enormous; always a multiple of 128 (unmasked vst).
    d128 = _round_up(max(D, 1), 128)
    tl = min(d128, 16384)

    def tm_for(tl_):
        return budget // (4 * tl_ * itemsize)

    # If even a minimal row tile would not fit the budget, shrink the lane tile.
    while tl > 128 and tm_for(tl) < sublane_align:
        tl = max(128, ((tl // 2) // 128) * 128)

    tm = min(4096, tm_for(tl))
    # Megacore (v7x): keep >= 2 row blocks so both TensorCores get work.
    if N > sublane_align:
        tm = min(tm, _round_up(pl.cdiv(N, 2), sublane_align))
    tm = min(tm, _round_up(N, sublane_align))
    tm = max(sublane_align, (tm // sublane_align) * sublane_align)
    return tm, tl


def diag_dgl_forward(features, W, *, tm=None, tl=None,
                     min_kernel_elements=1 << 20, force_kernel=False):
    """DiagDGL.forward: features * W (W broadcast over rows). `g` is unused."""
    N, D = features.shape
    assert W.shape == (D,)
    # Cast once in the wrapper so the kernel is a single VPU multiply per vreg.
    w = W.astype(features.dtype)

    # Tiny inputs: pallas_call launch + DMA overhead dwarfs the work; XLA's
    # fused elementwise multiply is already at the HBM roofline.
    if not force_kernel and N * D < min_kernel_elements:
        return features * w[None, :]

    itemsize = jnp.dtype(features.dtype).itemsize
    vmem = _vmem_capacity_bytes()
    sublane_align = max(8, 32 // itemsize)

    auto_tm, auto_tl = _pick_tiles(N, D, itemsize, vmem)
    if tm is None:
        tm = auto_tm
    else:
        tm = max(sublane_align, _round_up(tm, sublane_align))
    if tl is None:
        tl = auto_tl
    else:
        tl = max(128, _round_up(tl, 128))

    w_row = w.reshape(1, D)

    n_row_blocks = pl.cdiv(N, tm)
    n_lane_blocks = pl.cdiv(D, tl)

    # Scoped VMEM: double-buffered feat-in + out tiles + resident W row,
    # with headroom, clamped to the chip's per-core capacity.
    tile_bytes = (4 * tm * tl + 2 * tl) * itemsize
    vmem_limit = int(tile_bytes * 1.5) + (4 << 20)
    vmem_limit = min(vmem_limit, vmem - (8 << 20))
    vmem_limit = max(vmem_limit, 16 << 20)

    if n_lane_blocks == 1:
        # 1-D row grid: W row fetched once (constant index_map), each feature
        # tile is one contiguous DMA of tm * D_rounded bytes.
        grid = (n_row_blocks,)
        in_specs = [
            pl.BlockSpec((1, tl), lambda i: (0, 0)),
            pl.BlockSpec((tm, tl), lambda i: (i, 0)),
        ]
        out_spec = pl.BlockSpec((tm, tl), lambda i: (i, 0))
        dim_sem = ("parallel",)
    else:
        grid = (n_row_blocks, n_lane_blocks)
        in_specs = [
            pl.BlockSpec((1, tl), lambda i, j: (0, j)),
            pl.BlockSpec((tm, tl), lambda i, j: (i, j)),
        ]
        out_spec = pl.BlockSpec((tm, tl), lambda i, j: (i, j))
        dim_sem = ("parallel", "parallel")

    out = pl.pallas_call(
        _diag_dgl_kernel,
        out_shape=jax.ShapeDtypeStruct((N, D), features.dtype),
        grid_spec=pltpu.PrefetchScalarGridSpec(
            num_scalar_prefetch=0,
            grid=grid,
            in_specs=in_specs,
            out_specs=out_spec,
        ),
        compiler_params=pltpu.CompilerParams(
            dimension_semantics=dim_sem,
            vmem_limit_bytes=vmem_limit,
        ),
    )(w_row, features)

    return out


if __name__ == "__main__":
    # Small shapes consistent with the module: N nodes, input_size features.
    N, input_size = 16, 128

    key = jax.random.PRNGKey(0)
    features = jax.random.normal(key, (N, input_size), dtype=jnp.float32)

    # Deterministic parameter init, matching nn.Parameter(torch.ones(input_size)).
    W = jnp.ones((input_size,), dtype=jnp.float32)

    # `g` (the graph) is unused by the forward pass; omitted here.
    # force_kernel=True so the tiny demo still exercises the Pallas path.
    out = diag_dgl_forward(features, W, force_kernel=True)
    out = jax.block_until_ready(out)

    # Reference check in plain JAX.
    ref = features * W[None, :]
    assert out.shape == (N, input_size)
    assert jnp.allclose(out, ref, atol=1e-6, rtol=1e-6)

    # Also exercise an unaligned shape through the masked-boundary path.
    N2, D2 = 37, 200
    f2 = jax.random.normal(jax.random.PRNGKey(1), (N2, D2), dtype=jnp.float32)
    W2 = jax.random.normal(jax.random.PRNGKey(2), (D2,), dtype=jnp.float32)
    out2 = jax.block_until_ready(diag_dgl_forward(f2, W2, force_kernel=True))
    assert jnp.allclose(out2, f2 * W2[None, :], atol=1e-6, rtol=1e-6)

    print("KERNEL_OK")
</pallas_src>

<mosaic_0001>
module attributes {stable_mosaic.version = 11 : i64} {
  func.func @_diag_dgl_kernel(%arg0: i32, %arg1: memref<1x128xf32, #tpu.memory_space<vmem>>, %arg2: memref<8x128xf32, #tpu.memory_space<vmem>>, %arg3: memref<8x128xf32, #tpu.memory_space<vmem>>) attributes {dimension_semantics = [#tpu.dimension_semantics<parallel>], iteration_bounds = array<i64: 2>, scalar_prefetch = 0 : i64, scratch_operands = 0 : i64, tpu.core_type = #tpu.core_type<tc>, window_params = [{pipeline_mode = #tpu.pipeline_mode<synchronous>, transform_indices = @transform_0, window_bounds = array<i64: 1, 128>}, {transform_indices = @transform_1, window_bounds = array<i64: 8, 128>}, {transform_indices = @transform_2, window_bounds = array<i64: 8, 128>}]} {
    %c0 = arith.constant 0 : index
    %c0_0 = arith.constant 0 : index
    %0 = vector.load %arg2[%c0, %c0_0] : memref<8x128xf32, #tpu.memory_space<vmem>>, vector<8x128xf32>
    %c0_1 = arith.constant 0 : index
    %c0_2 = arith.constant 0 : index
    %1 = vector.load %arg1[%c0_1, %c0_2] : memref<1x128xf32, #tpu.memory_space<vmem>>, vector<1x128xf32>
    %2 = vector.broadcast %1 : vector<1x128xf32> to vector<8x128xf32>
    %3 = arith.mulf %0, %2 : vector<8x128xf32>
    %c0_3 = arith.constant 0 : index
    %c0_4 = arith.constant 0 : index
    %4 = vector.load %arg3[%c0_3, %c0_4] : memref<8x128xf32, #tpu.memory_space<vmem>>, vector<8x128xf32>
    tpu.vector_store %arg3[%c0_3, %c0_4], %3 {strides = array<i32>} : memref<8x128xf32, #tpu.memory_space<vmem>>, vector<8x128xf32>,
    return
  }
  func.func @transform_0(%arg0: i32) -> (i32, i32) {
    %c0_i32 = arith.constant 0 : i32
    %c0_i32_0 = arith.constant 0 : i32
    %c0_i32_1 = arith.constant 0 : i32
    return %c0_i32, %c0_i32_0 : i32, i32
  }
  func.func @transform_1(%arg0: i32) -> (i32, i32) {
    %c0_i32 = arith.constant 0 : i32
    %c0_i32_0 = arith.constant 0 : i32
    return %arg0, %c0_i32 : i32, i32
  }
  func.func @transform_2(%arg0: i32) -> (i32, i32) {
    %c0_i32 = arith.constant 0 : i32
    %c0_i32_0 = arith.constant 0 : i32
    return %arg0, %c0_i32 : i32, i32
  }
}

</mosaic_0001>

<llo_original>
// kernel: tpu_custom_call.1
$region0: #{tpu_custom_call.1}
  #allocation0 [shape = 'u32[]', space=smem, size = 0x4, offset = 0x4, fixed_abs, tag = 'smem constant byte address 0x4 - core index']
  #allocation1 [shape = 'u32[72,128]{1,0:T(1,128)}', space=vmem, size = 0x9000, scoped, tag = 'internal scratch']
  %s0 = inlined_call_operand.hbm [shape: f32[1,128], index: 0, kind: input, shape index: {}]
  %s1 = inlined_call_operand.hbm [shape: f32[16,128], index: 1, kind: input, shape index: {}]
  %s2 = inlined_call_operand.hbm [shape: f32[16,128], index: 2, kind: output, shape index: {}]
  %s3 = sld [smem:[#allocation0]]
  $region49: #{tpu_custom_call.1} parent=0
    _
  %s5 = ssub.s32 1, %s3
  %s6 = scalar_select 0, %s5, %s3
  $region1: #{tpu_custom_call.1} parent=0
    #allocation2 [shape = 'u8[512]{0}', space=vmem, size = 0x400, scoped, tag = 'input window, operand 0, single buffered']
    #allocation3 [shape = 's32[2]{0}', space=sflag, size = 0x8, scoped, tag = 'scoped memory for tpu_custom_call.1']
    #allocation4 [shape = 's32[2]{0}', space=sflag, size = 0x8, scoped, tag = 'scoped memory for tpu_custom_call.1']
    #allocation5 [shape = 'u8[8192]{0}', space=vmem, size = 0x2000, scoped, tag = 'input window, operand 1']
    #allocation6 [shape = 's32[2]{0}', space=sflag, size = 0x8, scoped, tag = 'scoped memory for tpu_custom_call.1']
    #allocation7 [shape = 'u8[8192]{0}', space=vmem, size = 0x2000, scoped, tag = 'output window, operand 0']
    %7 = vsyncpa [#allocation3], 0
    %8 = vsyncpa [#allocation6], 0
    %s9 = scalar_lea.sflag [#allocation6], 1
    %10 = vsyncpa %s9, 0
    %11 = vsyncpa [#allocation4], 0
    %s12 = scalar_lea.sflag [#allocation4], 1
    %13 = vsyncpa %s12, 0
    loop: start=0, step=1, limit=4
    $region2: #{tpu_custom_call.1} parent=1 // loop_pre_header
      _
    $region3: #{tpu_custom_call.1} parent=1 // loop_header
      %s15 = sphi 0, %s19
      %p16 = scmp.ge.s32.totalorder %s15, 4
      %s23 = sphi 0, %s23
      %s25 = sphi 0, %s23
      %s26 = sphi 0, %s25
      %s40 = sphi 0, %s26
      %s46 = sphi 0, %s48
      %s49 = sphi 0, %s46
      %s50 = sphi 0, %s49
      %s66 = sphi 0, %s50
      %s72 = sphi 0, %s74
      %s75 = sphi 0, %s72
      %s76 = sphi 0, %s75
      %s92 = sphi 0, %s76
    $region4: #{tpu_custom_call.1} parent=1 // loop_header_branch
      %18 = sbr.rel (%p16) target = $region8
    $region5: #{tpu_custom_call.1} parent=1 // loop_body
      %s20 = ssub.s32 %s15, 1
      %s21 = ssub.s32 %s15, 2
      %s22 = sadd.s32 %s15, 1
      %s24 = sadd.s32 %s23, 1
      %p27 = scmp.eq.s32.totalorder %s15, 1
      %p28 = scmp.ne.s32.totalorder %s23, %s25
      %p29 = scmp.eq.s32.totalorder %s15, 0
      %p30 = por %p28, %p29
      %p31 = scmp.ne.s32.totalorder %s23, %s25
      %p32 = scmp.eq.s32.totalorder %s20, 1
      %p33 = por %p31, %p32
      %p34 = scmp.ne.s32.totalorder %s25, %s26
      %p35 = scmp.eq.s32.totalorder %s20, 0
      %p36 = por %p34, %p35
      %p37 = scmp.ne.s32.totalorder %s25, %s26
      %p38 = scmp.eq.s32.totalorder %s21, 1
      %p39 = por %p37, %p38
      %p41 = scmp.ne.s32.totalorder %s26, %s40
      %p42 = scmp.eq.s32.totalorder %s21, 0
      %p43 = por %p41, %p42
      %s44 = ssub.s32 %s15, %s22
      %p45 = scmp.eq.s32.totalorder %s44, 0
      %s47 = sadd.s32 %s46, 1
      %s48 = scalar_select %p45, %s46, %s47
      %p51 = pneg %p45
      %p52 = scmp.eq.s32.totalorder %s15, 1
      %p53 = por %p51, %p52
      %p54 = scmp.ne.s32.totalorder %s46, %s49
      %p55 = scmp.eq.s32.totalorder %s15, 0
      %p56 = por %p54, %p55
      %p57 = scmp.ne.s32.totalorder %s46, %s49
      %p58 = scmp.eq.s32.totalorder %s20, 1
      %p59 = por %p57, %p58
      %p60 = scmp.ne.s32.totalorder %s49, %s50
      %p61 = scmp.eq.s32.totalorder %s20, 0
      %p62 = por %p60, %p61
      %p63 = scmp.ne.s32.totalorder %s49, %s50
      %p64 = scmp.eq.s32.totalorder %s21, 1
      %p65 = por %p63, %p64
      %p67 = scmp.ne.s32.totalorder %s50, %s66
      %p68 = scmp.eq.s32.totalorder %s21, 0
      %p69 = por %p67, %p68
      %s70 = ssub.s32 %s15, %s22
      %p71 = scmp.eq.s32.totalorder %s70, 0
      %s73 = sadd.s32 %s72, 1
      %s74 = scalar_select %p71, %s72, %s73
      %p77 = pneg %p71
      %p78 = scmp.eq.s32.totalorder %s15, 1
      %p79 = por %p77, %p78
      %p80 = scmp.ne.s32.totalorder %s72, %s75
      %p81 = scmp.eq.s32.totalorder %s15, 0
      %p82 = por %p80, %p81
      %p83 = scmp.ne.s32.totalorder %s72, %s75
      %p84 = scmp.eq.s32.totalorder %s20, 1
      %p85 = por %p83, %p84
      %p86 = scmp.ne.s32.totalorder %s75, %s76
      %p87 = scmp.eq.s32.totalorder %s20, 0
      %p88 = por %p86, %p87
      %p89 = scmp.ne.s32.totalorder %s75, %s76
      %p90 = scmp.eq.s32.totalorder %s21, 1
      %p91 = por %p89, %p90
      %p93 = scmp.ne.s32.totalorder %s76, %s92
      %p94 = scmp.eq.s32.totalorder %s21, 0
      %p95 = por %p93, %p94
      %p96 = scmp.le.s32.totalorder 1, %s15
      %p97 = scmp.lt.s32.totalorder %s15, 3
      %p98 = pnand %p96, %p97
      %p99 = pneg %p98
      // Predicated region
      $region9: #{tpu_custom_call.1} parent=5 // pred_check
        _
      $region10: #{tpu_custom_call.1} parent=5 // pred_check_branch
        %101 = sbr.rel (%p98) target = $region12
      $region11: #{tpu_custom_call.1} parent=5 // pred_region
        %s102 = ssub.s32 %s15, 1
        // Predicated region
        $region13: #{tpu_custom_call.1} parent=11 // pred_check
          %p103 = pneg %p36
        $region14: #{tpu_custom_call.1} parent=11 // pred_check_branch
          %105 = sbr.rel (%p103) target = $region16
        $region15: #{tpu_custom_call.1} parent=11 // pred_region
          %107 = vsyncadd [#allocation3], 0
          %s109 = sshll.u32 %s0, 4
          %s110 = int_to_ptr.hbm [resolvable:$true] %s109
          %s111 = sshll.u32 [#allocation2], 4
          %s112 = int_to_ptr.vmem [resolvable:$true] %s111
          %114 = dma.hbm_to_vmem [thread:$0]  %s110, 16, %s112, [#allocation3]
        $region16: #{tpu_custom_call.1} parent=11 // pred_fallthru
          _
      $region12: #{tpu_custom_call.1} parent=5 // pred_fallthru
        _
      %p115 = scmp.lt.s32.totalorder %s15, 2
      // Predicated region
      $region17: #{tpu_custom_call.1} parent=5 // pred_check
        %p116 = pneg %p115
      $region18: #{tpu_custom_call.1} parent=5 // pred_check_branch
        %118 = sbr.rel (%p116) target = $region20
      $region19: #{tpu_custom_call.1} parent=5 // pred_region
        // Predicated region
        $region21: #{tpu_custom_call.1} parent=19 // pred_check
          %p119 = pneg %p56
        $region22: #{tpu_custom_call.1} parent=19 // pred_check_branch
          %121 = sbr.rel (%p119) target = $region24
        $region23: #{tpu_custom_call.1} parent=19 // pred_region
          %s122 = sand.u32 %s46, 1
          %s123 = scalar_lea.sflag [#allocation6], %s122
          %s124 = sand.u32 %s46, 1
          %s125 = smul.addr %s124, 8
          %s126 = scalar_lea.vmem [#allocation5], %s125
          %128 = vsyncadd %s123, 0
          %s129 = smul.addr %s15, 8
          %s130 = scalar_lea.hbm %s1, %s129
          %s132 = sshll.u32 %s130, 4
          %s133 = int_to_ptr.hbm [resolvable:$true] %s132
          %s134 = sshll.u32 %s126, 4
          %s135 = int_to_ptr.vmem [resolvable:$true] %s134
          %137 = dma.hbm_to_vmem [thread:$0]  %s133, 128, %s135, %s123
        $region24: #{tpu_custom_call.1} parent=19 // pred_fallthru
          _
      $region20: #{tpu_custom_call.1} parent=5 // pred_fallthru
        _
      %p138 = scmp.le.s32.totalorder 1, %s15
      %p139 = scmp.lt.s32.totalorder %s15, 3
      %p140 = pnand %p138, %p139
      %p141 = pneg %p140
      // Predicated region
      $region25: #{tpu_custom_call.1} parent=5 // pred_check
        _
      $region26: #{tpu_custom_call.1} parent=5 // pred_check_branch
        %143 = sbr.rel (%p140) target = $region28
      $region27: #{tpu_custom_call.1} parent=5 // pred_region
        %s144 = ssub.s32 %s15, 1
        // Predicated region
        $region29: #{tpu_custom_call.1} parent=27 // pred_check
          %p145 = pneg %p36
        $region30: #{tpu_custom_call.1} parent=27 // pred_check_branch
          %147 = sbr.rel (%p145) target = $region32
        $region31: #{tpu_custom_call.1} parent=27 // pred_region
          %149 = dma.done [#allocation3], 16
        $region32: #{tpu_custom_call.1} parent=27 // pred_fallthru
          _
        %s150 = sand.u32 %s49, 1
        %s151 = scalar_lea.sflag [#allocation6], %s150
        %s152 = sand.u32 %s49, 1
        %s153 = smul.addr %s152, 8
        %s154 = scalar_lea.vmem [#allocation5], %s153
        // Predicated region
        $region33: #{tpu_custom_call.1} parent=27 // pred_check
          %p155 = pneg %p62
        $region34: #{tpu_custom_call.1} parent=27 // pred_check_branch
          %157 = sbr.rel (%p155) target = $region36
        $region35: #{tpu_custom_call.1} parent=27 // pred_region
          %159 = dma.done %s151, 128
        $region36: #{tpu_custom_call.1} parent=27 // pred_fallthru
          _
        %p160 = pneg %p36
        %p161 = pneg %p33
        %s162 = sand.u32 %s49, 1
        %s163 = scalar_lea.sflag [#allocation6], %s162
        %s164 = sand.u32 %s49, 1
        %s165 = smul.addr %s164, 8
        %s166 = scalar_lea.vmem [#allocation5], %s165
        %p167 = pneg %p62
        %p168 = pneg %p59
        %p169 = pneg %p88
        %p170 = pneg %p85
        %s171 = sand.u32 %s75, 1
        %s172 = scalar_lea.sflag [#allocation4], %s171
        %s173 = sand.u32 %s75, 1
        %s174 = smul.addr %s173, 8
        %s175 = scalar_lea.vmem [#allocation7], %s174
        %v176 = vld [vmem:[%s154] sm:$0xff]
        %v177 = vld [vmem:[#allocation2] sm:$0x1]
        %v179 = vperm.slane %v177, 0
        %v181 = vmul.f32 %v176, %v179
        %182 = vst [vmem:[%s175] sm:$0xff] %v181
        %s183 = sand.u32 %s75, 1
        %s184 = scalar_lea.sflag [#allocation4], %s183
        %s185 = sand.u32 %s75, 1
        %s186 = smul.addr %s185, 8
        %s187 = scalar_lea.vmem [#allocation7], %s186
        // Predicated region
        $region37: #{tpu_custom_call.1} parent=27 // pred_check
          %p188 = pneg %p85
        $region38: #{tpu_custom_call.1} parent=27 // pred_check_branch
          %190 = sbr.rel (%p188) target = $region40
        $region39: #{tpu_custom_call.1} parent=27 // pred_region
          %192 = vsyncadd %s184, 0
          %s193 = smul.addr %s20, 8
          %s194 = scalar_lea.hbm %s2, %s193
          %s196 = sshll.u32 %s187, 4
          %s197 = int_to_ptr.vmem [resolvable:$true] %s196
          %s198 = sshll.u32 %s194, 4
          %s199 = int_to_ptr.hbm [resolvable:$true] %s198
          %201 = dma.vmem_to_hbm [thread:$0]  %s197, 128, %s199, %s184
        $region40: #{tpu_custom_call.1} parent=27 // pred_fallthru
          _
      $region28: #{tpu_custom_call.1} parent=5 // pred_fallthru
        _
      %p202 = scmp.le.s32.totalorder 2, %s15
      // Predicated region
      $region41: #{tpu_custom_call.1} parent=5 // pred_check
        %p203 = pneg %p202
      $region42: #{tpu_custom_call.1} parent=5 // pred_check_branch
        %205 = sbr.rel (%p203) target = $region44
      $region43: #{tpu_custom_call.1} parent=5 // pred_region
        %s206 = ssub.s32 %s15, 2
        // Predicated region
        $region45: #{tpu_custom_call.1} parent=43 // pred_check
          %p207 = pneg %p91
        $region46: #{tpu_custom_call.1} parent=43 // pred_check_branch
          %209 = sbr.rel (%p207) target = $region48
        $region47: #{tpu_custom_call.1} parent=43 // pred_region
          %s210 = sand.u32 %s76, 1
          %s211 = scalar_lea.sflag [#allocation4], %s210
          %s212 = sand.u32 %s76, 1
          %s213 = smul.addr %s212, 8
          %s214 = scalar_lea.vmem [#allocation7], %s213
          %216 = dma.done %s211, 128
        $region48: #{tpu_custom_call.1} parent=43 // pred_fallthru
          _
      $region44: #{tpu_custom_call.1} parent=5 // pred_fallthru
        _
    $region6: #{tpu_custom_call.1} parent=1 // loop_footer
      %s19 = sadd.s32 1, %s15
    $region7: #{tpu_custom_call.1} parent=1 // loop_footer_branch
      %14 = sbr.rel target = $region3
    $region8: #{tpu_custom_call.1} parent=1 // loop_exit
      _
    %217 = vsyncpa [#allocation3], 1
    %s218 = scalar_lea.sflag [#allocation3], 1
    %219 = vsyncpa %s218, 1
    %220 = vsyncpa [#allocation6], 1
    %s221 = scalar_lea.sflag [#allocation6], 1
    %222 = vsyncpa %s221, 1
    %223 = vsyncpa [#allocation4], 1
    %s224 = scalar_lea.sflag [#allocation4], 1
    %225 = vsyncpa %s224, 1

</llo_original>
